<compile_context>
chip_gen: v5e
topology: v5e:2x2
jax: 0.10.0
libtpu: 0.0.40
codegen_flags: <defaults>
</compile_context>

<pallas_src>
import functools
import math

import numpy as np
import jax
import jax.numpy as jnp
from jax.experimental import pallas as pl
from jax.experimental.pallas import tpu as pltpu


def _round_up(n, m):
    return (n + m - 1) // m * m


# ----------------------------------------------------------------------------
# Fused direct convolution kernel (tap-stacked matmul, per-batch grid)
# ----------------------------------------------------------------------------
def _conv_kernel(x_ref, w_ref, b_ref, *rest, offsets, Npad,
                 pre_groups, post_groups, n_pre, n_post, eps):
    """One batch element.

    x_ref : (1, Cin_pad, Xlen) zero-padded row-flattened input (bf16)
    w_ref : (Cout, kh*kw*Cin_pad) tap-stacked weights (bf16)
    b_ref : (Cout, 1) bias (f32)
    rest  : optional [gamma1 (G,cg,1), beta1, mask1 (1,Xlen)]  fused GN+SiLU prologue
            optional [gamma2, beta2, mask2 (1,Npad)]           fused GN+SiLU epilogue
            then o_ref (1, Cout, Npad)
    Junk output columns (flat col % Wp >= Wout or >= Nflat) are sliced off in XLA.
    """
    idx = 0
    if pre_groups:
        g1_ref, bt1_ref, m1_ref = rest[0], rest[1], rest[2]
        idx = 3
    if post_groups:
        g2_ref, bt2_ref, m2_ref = rest[idx], rest[idx + 1], rest[idx + 2]
        idx += 3
    o_ref = rest[idx]

    xin = x_ref[0]                                              # (Cin_pad, Xlen) bf16
    if pre_groups:
        # GroupNorm + SiLU prologue. Padding positions are already zero, so plain
        # sums / n_pre give stats over the valid region; after affine+SiLU the
        # padding is re-zeroed so the conv keeps its zero-padding semantics.
        xf = xin.astype(jnp.float32)
        G = pre_groups
        cg = xf.shape[0] // G
        xg = xf.reshape(G, cg, xf.shape[1])
        mean = jnp.sum(xg, axis=(1, 2), keepdims=True) * (1.0 / n_pre)
        var = jnp.sum(xg * xg, axis=(1, 2), keepdims=True) * (1.0 / n_pre) - mean * mean
        sc = g1_ref[...] * jax.lax.rsqrt(var + eps)             # per-channel scale
        sh = bt1_ref[...] - mean * sc                           # per-channel shift
        y = xg * sc + sh
        y = y * jax.nn.sigmoid(y)                               # SiLU
        xs = (y * m1_ref[...]).reshape(xf.shape).astype(jnp.bfloat16)
    else:
        xs = xin

    # Tap-stacked contraction: one big MXU matmul, K = kh*kw*Cin_pad.
    if len(offsets) > 1:
        slab = jnp.concatenate([xs[:, o:o + Npad] for o in offsets], axis=0)
    else:
        slab = xs[:, offsets[0]:offsets[0] + Npad]
    acc = jnp.dot(w_ref[...], slab, preferred_element_type=jnp.float32)
    acc = acc + b_ref[...]                                      # fused bias

    if post_groups:
        # GroupNorm + SiLU epilogue; junk columns are masked out of the statistics
        # (their values stay garbage and are dropped by the consumer slice).
        G = post_groups
        cg = acc.shape[0] // G
        ag = acc.reshape(G, cg, Npad)
        agm = ag * m2_ref[...]
        mean = jnp.sum(agm, axis=(1, 2), keepdims=True) * (1.0 / n_post)
        var = jnp.sum(agm * agm, axis=(1, 2), keepdims=True) * (1.0 / n_post) - mean * mean
        sc = g2_ref[...] * jax.lax.rsqrt(var + eps)
        sh = bt2_ref[...] - mean * sc
        y = ag * sc + sh
        acc = (y * jax.nn.sigmoid(y)).reshape(acc.shape)

    o_ref[0] = acc.astype(o_ref.dtype)


def conv2d(x, w, b, *, stride=1, pad=(1, 1, 1, 1), gn_pre=None, gn_post=None,
           out_dtype=jnp.bfloat16, eps=1e-5):
    """Conv2d (PyTorch semantics). x:(B,Cin,H,W), w:(Cout,Cin,kh,kw), b:(Cout,).

    gn_pre /gn_post = (gamma, beta, groups) fuse a GroupNorm+SiLU prologue on the
    input / epilogue on the output into the same kernel.  One kernel call per
    batch element (grid axis marked "parallel").
    """
    B, Cin, H, W = x.shape
    Cout, _, kh, kw = w.shape
    pt, pb, pL, pR = pad
    Hp, Wp = H + pt + pb, W + pL + pR
    Hout, Wout = Hp - kh + 1, Wp - kw + 1
    Nflat = Hout * Wp
    Npad = _round_up(Nflat, 128)                 # lane-dense output width
    max_off = (kh - 1) * Wp + (kw - 1)
    Xlen = max_off + Npad                        # every tap slice stays in-bounds
    Cin_pad = _round_up(Cin, 8)
    if gn_pre is not None:
        assert Cin_pad == Cin                    # GN channels are multiples of 32

    # TODO(synk): the zero pad / bf16 cast and the final reshape+slice are tiny XLA
    # ops at these shapes; at production sizes move them in-kernel (DMA the unpadded
    # tile into a zeroed VMEM slab) and chain the padded flat layout between convs.
    xp = jnp.pad(x.astype(jnp.bfloat16), ((0, 0), (0, 0), (pt, pb), (pL, pR)))
    if Cin_pad != Cin:
        xp = jnp.pad(xp, ((0, 0), (0, Cin_pad - Cin), (0, 0), (0, 0)))
    xf = jnp.pad(xp.reshape(B, Cin_pad, Hp * Wp),
                 ((0, 0), (0, 0), (0, Xlen - Hp * Wp)))

    wpad = w if Cin_pad == Cin else jnp.pad(w, ((0, 0), (0, Cin_pad - Cin), (0, 0), (0, 0)))
    w2 = wpad.transpose(0, 2, 3, 1).reshape(Cout, kh * kw * Cin_pad).astype(jnp.bfloat16)
    b2 = b.reshape(Cout, 1).astype(jnp.float32)
    offsets = tuple(dy * Wp + dx for dy in range(kh) for dx in range(kw))

    args = [xf, w2, b2]
    in_specs = [pl.BlockSpec((1, Cin_pad, Xlen), lambda i: (i, 0, 0)),
                pl.BlockSpec((Cout, kh * kw * Cin_pad), lambda i: (0, 0)),
                pl.BlockSpec((Cout, 1), lambda i: (0, 0))]

    pre_groups = post_groups = 0
    n_pre = n_post = 1
    if gn_pre is not None:
        g1, bt1, pre_groups = gn_pre
        cg1 = Cin // pre_groups
        pos = np.arange(Xlen)
        row, col = pos // Wp, pos % Wp
        m1 = ((pos < Hp * Wp) & (row >= pt) & (row < pt + H)
              & (col >= pL) & (col < pL + W)).astype(np.float32).reshape(1, Xlen)
        n_pre = cg1 * H * W
        # TODO(synk): these tiny masks could be generated in-kernel from iota to
        # save one small DMA per fused-GN conv.
        args += [g1.reshape(pre_groups, cg1, 1).astype(jnp.float32),
                 bt1.reshape(pre_groups, cg1, 1).astype(jnp.float32),
                 jnp.asarray(m1)]
        in_specs += [pl.BlockSpec((pre_groups, cg1, 1), lambda i: (0, 0, 0)),
                     pl.BlockSpec((pre_groups, cg1, 1), lambda i: (0, 0, 0)),
                     pl.BlockSpec((1, Xlen), lambda i: (0, 0))]
    if gn_post is not None:
        g2, bt2, post_groups = gn_post
        cg2 = Cout // post_groups
        q = np.arange(Npad)
        m2 = ((q < Nflat) & (q % Wp < Wout)).astype(np.float32).reshape(1, Npad)
        n_post = cg2 * Hout * Wout
        args += [g2.reshape(post_groups, cg2, 1).astype(jnp.float32),
                 bt2.reshape(post_groups, cg2, 1).astype(jnp.float32),
                 jnp.asarray(m2)]
        in_specs += [pl.BlockSpec((post_groups, cg2, 1), lambda i: (0, 0, 0)),
                     pl.BlockSpec((post_groups, cg2, 1), lambda i: (0, 0, 0)),
                     pl.BlockSpec((1, Npad), lambda i: (0, 0))]

    out = pl.pallas_call(
        functools.partial(_conv_kernel, offsets=offsets, Npad=Npad,
                          pre_groups=pre_groups, post_groups=post_groups,
                          n_pre=n_pre, n_post=n_post, eps=eps),
        out_shape=jax.ShapeDtypeStruct((B, Cout, Npad), out_dtype),
        grid=(B,),
        in_specs=in_specs,
        out_specs=pl.BlockSpec((1, Cout, Npad), lambda i: (i, 0, 0)),
        compiler_params=pltpu.CompilerParams(dimension_semantics=("parallel",)),
    )(*args)

    out = out[:, :, :Nflat].reshape(B, Cout, Hout, Wp)[:, :, :, :Wout]
    if stride != 1:
        # TODO(synk): for the single Downsample layer, compute the stride-2 output
        # columns directly (strided tap slices) instead of stride-1 + subsample.
        out = out[:, :, ::stride, ::stride]
    return out


# ----------------------------------------------------------------------------
# Fused attention block: GN + QKV proj + softmax(QK^T/sqrt(C))V + out proj + residual
# ----------------------------------------------------------------------------
def _attn_kernel(x_ref, g_ref, bt_ref, wi_ref, bi_ref, wo_ref, bo_ref, o_ref,
                 *, groups, eps, scale):
    x = x_ref[0].astype(jnp.float32)                            # (C, L)
    C, L = x.shape
    cg = C // groups
    xg = x.reshape(groups, cg, L)
    mean = jnp.mean(xg, axis=(1, 2), keepdims=True)
    var = jnp.mean(xg * xg, axis=(1, 2), keepdims=True) - mean * mean
    sc = g_ref[...] * jax.lax.rsqrt(var + eps)
    sh = bt_ref[...] - mean * sc
    h = (xg * sc + sh).reshape(C, L).astype(jnp.bfloat16)       # GroupNorm (no SiLU)

    qkv = jnp.dot(wi_ref[...], h, preferred_element_type=jnp.float32) + bi_ref[...]
    q = qkv[0:C].astype(jnp.bfloat16)
    k = qkv[C:2 * C].astype(jnp.bfloat16)
    v = qkv[2 * C:3 * C].astype(jnp.bfloat16)
    # s[i,j] = q_i . k_j : contract the C axis of both operands (no XLU transpose).
    s = jax.lax.dot_general(q, k, (((0,), (0,)), ((), ())),
                            preferred_element_type=jnp.float32) * scale
    s = s - jnp.max(s, axis=-1, keepdims=True)
    p = jnp.exp(s)
    p = p * pl.reciprocal(jnp.sum(p, axis=-1, keepdims=True), approx=True)
    # TODO(synk): at production L switch to flash-style KV tiling (64 MiB VMEM on v7x).
    ctx = jax.lax.dot_general(v, p.astype(jnp.bfloat16), (((1,), (1,)), ((), ())),
                              preferred_element_type=jnp.float32)          # (C, L)
    proj = jnp.dot(wo_ref[...], ctx.astype(jnp.bfloat16),
                   preferred_element_type=jnp.float32) + bo_ref[...]
    o_ref[0] = (x + proj).astype(o_ref.dtype)                   # fused residual add


def apply_attn(x, p, *, groups=32, eps=1e-5):
    B, C, H, W = x.shape
    L = H * W
    cg = C // groups
    x2 = x.reshape(B, C, L)
    out = pl.pallas_call(
        functools.partial(_attn_kernel, groups=groups, eps=eps,
                          scale=1.0 / math.sqrt(C)),
        out_shape=jax.ShapeDtypeStruct((B, C, L), x.dtype),
        grid=(B,),
        in_specs=[pl.BlockSpec((1, C, L), lambda b: (b, 0, 0)),
                  pl.BlockSpec((groups, cg, 1), lambda b: (0, 0, 0)),
                  pl.BlockSpec((groups, cg, 1), lambda b: (0, 0, 0)),
                  pl.BlockSpec((3 * C, C), lambda b: (0, 0)),
                  pl.BlockSpec((3 * C, 1), lambda b: (0, 0)),
                  pl.BlockSpec((C, C), lambda b: (0, 0)),
                  pl.BlockSpec((C, 1), lambda b: (0, 0))],
        out_specs=pl.BlockSpec((1, C, L), lambda b: (b, 0, 0)),
        compiler_params=pltpu.CompilerParams(dimension_semantics=("parallel",)),
    )(x2,
      p['gn_g'].reshape(groups, cg, 1).astype(jnp.float32),
      p['gn_b'].reshape(groups, cg, 1).astype(jnp.float32),
      p['w_in'].astype(jnp.bfloat16), p['b_in'].reshape(3 * C, 1).astype(jnp.float32),
      p['w_out'].astype(jnp.bfloat16), p['b_out'].reshape(C, 1).astype(jnp.float32))
    return out.reshape(B, C, H, W)


# ----------------------------------------------------------------------------
# Depthwise separable Gaussian blur (reflect padding, learnable sigma)
# ----------------------------------------------------------------------------
def _blur_kernel(k_ref, x_ref, o_ref, *, Wp, Nh, Nvpad, ksize):
    x = x_ref[0].astype(jnp.float32)                            # (C, Xlen)
    hp = k_ref[0, 0] * x[:, 0:Nh]
    for i in range(1, ksize):
        hp = hp + k_ref[0, i] * x[:, i:i + Nh]
    out = k_ref[0, 0] * hp[:, 0:Nvpad]
    for i in range(1, ksize):
        out = out + k_ref[0, i] * hp[:, i * Wp:i * Wp + Nvpad]
    o_ref[0] = out.astype(o_ref.dtype)


def gaussian_blur(x, sigma, *, ksize=3):
    half = (ksize - 1) * 0.5
    grid1d = jnp.linspace(-half, half, ksize)
    pdf = jnp.exp(-0.5 * (grid1d / sigma) ** 2)
    k1 = (pdf / jnp.sum(pdf)).reshape(1, ksize).astype(jnp.float32)

    padr = ksize // 2
    B, C, H, W = x.shape
    Hp, Wp = H + 2 * padr, W + 2 * padr
    Nv = H * Wp
    Nvpad = _round_up(Nv, 128)                  # lane-dense output
    Nh = (ksize - 1) * Wp + Nvpad
    Xlen = (ksize - 1) + Nh
    # TODO(synk): at production sizes do the reflect padding in-kernel (pltpu.roll)
    # instead of this small XLA pad.
    xpad = jnp.pad(x, ((0, 0), (0, 0), (padr, padr), (padr, padr)), mode='reflect')
    xf = jnp.pad(xpad.reshape(B, C, Hp * Wp), ((0, 0), (0, 0), (0, Xlen - Hp * Wp)))

    out = pl.pallas_call(
        functools.partial(_blur_kernel, Wp=Wp, Nh=Nh, Nvpad=Nvpad, ksize=ksize),
        out_shape=jax.ShapeDtypeStruct((B, C, Nvpad), jnp.float32),
        grid=(B,),
        in_specs=[pl.BlockSpec(memory_space=pltpu.MemorySpace.SMEM),
                  pl.BlockSpec((1, C, Xlen), lambda b: (b, 0, 0))],
        out_specs=pl.BlockSpec((1, C, Nvpad), lambda b: (b, 0, 0)),
        compiler_params=pltpu.CompilerParams(dimension_semantics=("parallel",)),
    )(k1, xf)
    return out[:, :, :Nv].reshape(B, C, H, Wp)[:, :, :, :W]


# ----------------------------------------------------------------------------
# Parameter init (deterministic, synthetic)
# ----------------------------------------------------------------------------
class KeyGen:
    def __init__(self, key):
        self.key = key

    def __call__(self):
        self.key, sub = jax.random.split(self.key)
        return sub


def init_conv(kg, cout, cin, k):
    return {'w': 0.05 * jax.random.normal(kg(), (cout, cin, k, k), jnp.float32),
            'b': 0.01 * jax.random.normal(kg(), (cout,), jnp.float32)}


def init_resnet(kg, cin, cout):
    p = {'gn1_g': jnp.ones((cin,), jnp.float32), 'gn1_b': jnp.zeros((cin,), jnp.float32)}
    c1 = init_conv(kg, cout, cin, 3)
    p['conv1_w'], p['conv1_b'] = c1['w'], c1['b']
    p['gn2_g'] = jnp.ones((cout,), jnp.float32)
    p['gn2_b'] = jnp.zeros((cout,), jnp.float32)
    c2 = init_conv(kg, cout, cout, 3)
    p['conv2_w'], p['conv2_b'] = c2['w'], c2['b']
    if cin != cout:
        cs = init_conv(kg, cout, cin, 1)
        p['short_w'], p['short_b'] = cs['w'], cs['b']
    return p


def init_attn(kg, c):
    return {'gn_g': jnp.ones((c,), jnp.float32), 'gn_b': jnp.zeros((c,), jnp.float32),
            'w_in': 0.05 * jax.random.normal(kg(), (3 * c, c), jnp.float32),
            'b_in': jnp.zeros((3 * c,), jnp.float32),
            'w_out': 0.05 * jax.random.normal(kg(), (c, c), jnp.float32),
            'b_out': jnp.zeros((c,), jnp.float32)}


def init_encoder_params(kg, *, in_c=3, ch=32, ch_mult=(1, 2), num_res_blocks=1,
                        attn_resolutions=(8,), resolution=16, z_channels=32,
                        double_z=False, dsl_init_sigma=1.0):
    # TODO(synk): the reference module with double_z=True builds final Conv2d layers
    # with mismatched channels (2*z_channels -> z_channels input) and cannot run;
    # this example therefore uses double_z=False.
    p = {'sigmas': jnp.full((4,), dsl_init_sigma, jnp.float32),
         'conv_in': init_conv(kg, ch, in_c, 3)}
    curr_res = resolution
    in_ch_mult = (1,) + tuple(ch_mult)
    down = []
    for level in range(len(ch_mult)):
        block_in = ch * in_ch_mult[level]
        block_out = ch * ch_mult[level]
        for _ in range(num_res_blocks):
            down.append(('res', init_resnet(kg, block_in, block_out)))
            block_in = block_out
            if curr_res in attn_resolutions:
                down.append(('attn', init_attn(kg, block_in)))
        if level != len(ch_mult) - 1:
            down.append(('down', init_conv(kg, block_in, block_in, 3)))
            curr_res //= 2
    p['down'] = down
    p['mid'] = [('res', init_resnet(kg, block_in, block_in)),
                ('attn', init_attn(kg, block_in)),
                ('res', init_resnet(kg, block_in, block_in))]
    out_ch = 2 * z_channels if double_z else z_channels
    p['final'] = {'gn_g': jnp.ones((block_in,), jnp.float32),
                  'gn_b': jnp.zeros((block_in,), jnp.float32),
                  'conv1': init_conv(kg, out_ch, block_in, 3),
                  'conv2': init_conv(kg, z_channels, z_channels, 1)}
    return p


# ----------------------------------------------------------------------------
# Block forward functions
# ----------------------------------------------------------------------------
def apply_resnet(x, p):
    # conv1 carries both the leading GN+SiLU (prologue) and the trailing GN+SiLU
    # (epilogue); nn.Dropout(p=0.0) is an identity.
    h = conv2d(x, p['conv1_w'], p['conv1_b'], pad=(1, 1, 1, 1),
               gn_pre=(p['gn1_g'], p['gn1_b'], 32),
               gn_post=(p['gn2_g'], p['gn2_b'], 32))
    h = conv2d(h, p['conv2_w'], p['conv2_b'], pad=(1, 1, 1, 1))
    if 'short_w' in p:
        x = conv2d(x, p['short_w'], p['short_b'], pad=(0, 0, 0, 0))
    return (x + h).astype(jnp.bfloat16)


def apply_downsample(x, p):
    # F.pad(x, (0,1,0,1)) then Conv2d(k=3, stride=2, padding=0)
    return conv2d(x, p['w'], p['b'], stride=2, pad=(0, 1, 0, 1))


_APPLY = {'res': apply_resnet, 'attn': apply_attn, 'down': apply_downsample}


def encoder_gauss_forward(params, x, inference=False):
    inter_features = []
    h = conv2d(x, params['conv_in']['w'], params['conv_in']['b'], pad=(1, 1, 1, 1))
    inter_features.append(h.astype(jnp.float32) if inference
                          else gaussian_blur(h, params['sigmas'][0]))
    for kind, bp in params['down']:
        h = _APPLY[kind](h, bp)
    inter_features.append(h.astype(jnp.float32) if inference
                          else gaussian_blur(h, params['sigmas'][1]))
    for kind, bp in params['mid']:
        h = _APPLY[kind](h, bp)
    inter_features.append(h.astype(jnp.float32) if inference
                          else gaussian_blur(h, params['sigmas'][2]))
    fp = params['final']
    # final GN+SiLU fused as the prologue of the final 3x3 conv
    h = conv2d(h, fp['conv1']['w'], fp['conv1']['b'], pad=(1, 1, 1, 1),
               gn_pre=(fp['gn_g'], fp['gn_b'], 32))
    h = conv2d(h, fp['conv2']['w'], fp['conv2']['b'], pad=(0, 0, 0, 0),
               out_dtype=jnp.float32)
    inter_features.append(h if inference else gaussian_blur(h, params['sigmas'][3]))
    return h, inter_features


# ----------------------------------------------------------------------------
if __name__ == "__main__":
    root = jax.random.PRNGKey(0)
    x_key, p_key = jax.random.split(root)
    kg = KeyGen(p_key)

    # Small config consistent with the module: in_c=3, ch=32, ch_mult=(1,2),
    # num_res_blocks=1, attn at resolution 8, resolution=16, z_channels=32.
    params = init_encoder_params(kg)
    x = jax.random.normal(x_key, (2, 3, 16, 16), jnp.float32)

    h, feats = encoder_gauss_forward(params, x, inference=False)
    h = jax.block_until_ready(h)
    feats = [jax.block_until_ready(f) for f in feats]

    assert h.shape == (2, 32, 8, 8), h.shape
    assert feats[0].shape == (2, 32, 16, 16)
    assert feats[1].shape == (2, 64, 8, 8)
    assert feats[2].shape == (2, 64, 8, 8)
    assert feats[3].shape == (2, 32, 8, 8)
    assert all(bool(jnp.all(jnp.isfinite(f))) for f in feats)
    assert bool(jnp.all(jnp.isfinite(h)))
    print("KERNEL_OK")
</pallas_src>

<mosaic_0001>
module attributes {stable_mosaic.version = 11 : i64} {
  func.func @_conv_kernel(%arg0: i32, %arg1: memref<1x8x422xbf16, #tpu.memory_space<vmem>>, %arg2: memref<32x72xbf16, #tpu.memory_space<vmem>>, %arg3: memref<32x1xf32, #tpu.memory_space<vmem>>, %arg4: memref<1x32x384xbf16, #tpu.memory_space<vmem>>) attributes {dimension_semantics = [#tpu.dimension_semantics<parallel>], iteration_bounds = array<i64: 2>, scalar_prefetch = 0 : i64, scratch_operands = 0 : i64, tpu.core_type = #tpu.core_type<tc>, window_params = [{transform_indices = @transform_0, window_bounds = array<i64: 1, 8, 422>}, {pipeline_mode = #tpu.pipeline_mode<synchronous>, transform_indices = @transform_1, window_bounds = array<i64: 32, 72>}, {pipeline_mode = #tpu.pipeline_mode<synchronous>, transform_indices = @transform_2, window_bounds = array<i64: 32, 1>}, {transform_indices = @transform_3, window_bounds = array<i64: 1, 32, 384>}]} {
    %c0 = arith.constant 0 : index
    %c0_0 = arith.constant 0 : index
    %c0_1 = arith.constant 0 : index
    %0 = vector.load %arg1[%c0, %c0_0, %c0_1] : memref<1x8x422xbf16, #tpu.memory_space<vmem>>, vector<1x8x422xbf16>
    %1 = vector.shape_cast %0 : vector<1x8x422xbf16> to vector<8x422xbf16>
    %2 = vector.extract_strided_slice %1 {offsets = [0, 0], sizes = [8, 384], strides = [1, 1]} : vector<8x422xbf16> to vector<8x384xbf16>
    %3 = vector.extract_strided_slice %1 {offsets = [0, 1], sizes = [8, 384], strides = [1, 1]} : vector<8x422xbf16> to vector<8x384xbf16>
    %4 = vector.extract_strided_slice %1 {offsets = [0, 2], sizes = [8, 384], strides = [1, 1]} : vector<8x422xbf16> to vector<8x384xbf16>
    %5 = vector.extract_strided_slice %1 {offsets = [0, 18], sizes = [8, 384], strides = [1, 1]} : vector<8x422xbf16> to vector<8x384xbf16>
    %6 = vector.extract_strided_slice %1 {offsets = [0, 19], sizes = [8, 384], strides = [1, 1]} : vector<8x422xbf16> to vector<8x384xbf16>
    %7 = vector.extract_strided_slice %1 {offsets = [0, 20], sizes = [8, 384], strides = [1, 1]} : vector<8x422xbf16> to vector<8x384xbf16>
    %8 = vector.extract_strided_slice %1 {offsets = [0, 36], sizes = [8, 384], strides = [1, 1]} : vector<8x422xbf16> to vector<8x384xbf16>
    %9 = vector.extract_strided_slice %1 {offsets = [0, 37], sizes = [8, 384], strides = [1, 1]} : vector<8x422xbf16> to vector<8x384xbf16>
    %10 = vector.extract_strided_slice %1 {offsets = [0, 38], sizes = [8, 384], strides = [1, 1]} : vector<8x422xbf16> to vector<8x384xbf16>
    %11 = tpu.concatenate %2, %3, %4, %5, %6, %7, %8, %9, %10 in 0 : vector<8x384xbf16>, vector<8x384xbf16>, vector<8x384xbf16>, vector<8x384xbf16>, vector<8x384xbf16>, vector<8x384xbf16>, vector<8x384xbf16>, vector<8x384xbf16>, vector<8x384xbf16> -> vector<72x384xbf16>
    %c0_2 = arith.constant 0 : index
    %c0_3 = arith.constant 0 : index
    %12 = vector.load %arg2[%c0_2, %c0_3] : memref<32x72xbf16, #tpu.memory_space<vmem>>, vector<32x72xbf16>
    %cst = arith.constant dense<0.000000e+00> : vector<32x384xf32>
    %13 = tpu.matmul %12, %11, %cst {dimension_numbers = #tpu.dot_dimension_numbers<[1], [0], [0], [1], [0, 0, 1, 1], [], []>} : vector<32x72xbf16>, vector<72x384xbf16>, vector<32x384xf32> -> vector<32x384xf32>
    %c0_4 = arith.constant 0 : index
    %c0_5 = arith.constant 0 : index
    %14 = vector.load %arg3[%c0_4, %c0_5] : memref<32x1xf32, #tpu.memory_space<vmem>>, vector<32x1xf32>
    %15 = vector.broadcast %14 : vector<32x1xf32> to vector<32x384xf32>
    %16 = arith.addf %13, %15 : vector<32x384xf32>
    %17 = arith.truncf %16 : vector<32x384xf32> to vector<32x384xbf16>
    %c0_6 = arith.constant 0 : index
    %c0_7 = arith.constant 0 : index
    %c0_8 = arith.constant 0 : index
    %18 = vector.load %arg4[%c0_6, %c0_7, %c0_8] : memref<1x32x384xbf16, #tpu.memory_space<vmem>>, vector<1x32x384xbf16>
    %19 = vector.shape_cast %18 : vector<1x32x384xbf16> to vector<32x384xbf16>
    %20 = vector.shape_cast %17 : vector<32x384xbf16> to vector<1x32x384xbf16>
    tpu.vector_store %arg4[%c0_6, %c0_7, %c0_8], %20 {strides = array<i32>} : memref<1x32x384xbf16, #tpu.memory_space<vmem>>, vector<1x32x384xbf16>,
    return
  }
  func.func @transform_0(%arg0: i32) -> (i32, i32, i32) {
    %c0_i32 = arith.constant 0 : i32
    %c0_i32_0 = arith.constant 0 : i32
    %c0_i32_1 = arith.constant 0 : i32
    return %arg0, %c0_i32, %c0_i32_0 : i32, i32, i32
  }
  func.func @transform_1(%arg0: i32) -> (i32, i32) {
    %c0_i32 = arith.constant 0 : i32
    %c0_i32_0 = arith.constant 0 : i32
    %c0_i32_1 = arith.constant 0 : i32
    return %c0_i32, %c0_i32_0 : i32, i32
  }
  func.func @transform_2(%arg0: i32) -> (i32, i32) {
    %c0_i32 = arith.constant 0 : i32
    %c0_i32_0 = arith.constant 0 : i32
    %c0_i32_1 = arith.constant 0 : i32
    return %c0_i32, %c0_i32_0 : i32, i32
  }
  func.func @transform_3(%arg0: i32) -> (i32, i32, i32) {
    %c0_i32 = arith.constant 0 : i32
    %c0_i32_0 = arith.constant 0 : i32
    %c0_i32_1 = arith.constant 0 : i32
    return %arg0, %c0_i32, %c0_i32_0 : i32, i32, i32
  }
}

</mosaic_0001>

<llo_original>
// kernel: tpu_custom_call.1
$region0: #{tpu_custom_call.1}
  #allocation0 [shape = 'u32[]', space=smem, size = 0x4, offset = 0x4, fixed_abs, tag = 'smem constant byte address 0x4 - core index']
  #allocation1 [shape = 'u32[72,128]{1,0:T(1,128)}', space=vmem, size = 0x9000, scoped, tag = 'internal scratch']
  %s0 = inlined_call_operand.vmem [shape: bf16[2,8,422], index: 0, kind: input, shape index: {}]
  %s1 = inlined_call_operand.hbm [shape: bf16[32,72], index: 1, kind: input, shape index: {}]
  %s2 = inlined_call_operand.vmem [shape: f32[32,1], index: 2, kind: input, shape index: {}]
  %s3 = inlined_call_operand.hbm [shape: bf16[2,32,384], index: 3, kind: output, shape index: {}]
  %s4 = sld [smem:[#allocation0]]
  $region49: #{tpu_custom_call.1} parent=0
    _
  %s6 = ssub.s32 1, %s4
  %s7 = scalar_select 0, %s6, %s4
  $region1: #{tpu_custom_call.1} parent=0
    #allocation2 [shape = 'u8[8192]{0}', space=vmem, size = 0x2000, scoped, tag = 'input window, operand 1, single buffered']
    #allocation3 [shape = 's32[2]{0}', space=sflag, size = 0x8, scoped, tag = 'scoped memory for tpu_custom_call.1']
    #allocation4 [shape = 's32[2]{0}', space=sflag, size = 0x8, scoped, tag = 'scoped memory for tpu_custom_call.1']
    #allocation5 [shape = 'u8[49152]{0}', space=vmem, size = 0xc000, scoped, tag = 'output window, operand 0']
    %8 = vsyncpa [#allocation3], 0
    %9 = vsyncpa [#allocation4], 0
    %s10 = scalar_lea.sflag [#allocation4], 1
    %11 = vsyncpa %s10, 0
    loop: start=0, step=1, limit=4
    $region2: #{tpu_custom_call.1} parent=1 // loop_pre_header
      _
    $region3: #{tpu_custom_call.1} parent=1 // loop_header
      %s13 = sphi 0, %s17
      %p14 = scmp.ge.s32.totalorder %s13, 4
      %s23 = sphi 0, %s25
      %s26 = sphi 0, %s23
      %s27 = sphi 0, %s26
      %s43 = sphi 0, %s27
      %s47 = sphi 0, %s47
      %s49 = sphi 0, %s47
      %s50 = sphi 0, %s49
      %s64 = sphi 0, %s50
      %s68 = sphi 0, %s68
      %s70 = sphi 0, %s68
      %s71 = sphi 0, %s70
      %s85 = sphi 0, %s71
      %s91 = sphi 0, %s93
      %s94 = sphi 0, %s91
      %s95 = sphi 0, %s94
      %s111 = sphi 0, %s95
    $region4: #{tpu_custom_call.1} parent=1 // loop_header_branch
      %16 = sbr.rel (%p14) target = $region8
    $region5: #{tpu_custom_call.1} parent=1 // loop_body
      %s18 = ssub.s32 %s13, 1
      %s19 = ssub.s32 %s13, 2
      %s20 = sadd.s32 %s13, 1
      %s21 = ssub.s32 %s13, %s20
      %p22 = scmp.eq.s32.totalorder %s21, 0
      %s24 = sadd.s32 %s23, 1
      %s25 = scalar_select %p22, %s23, %s24
      %p28 = pneg %p22
      %p29 = scmp.eq.s32.totalorder %s13, 1
      %p30 = por %p28, %p29
      %p31 = scmp.ne.s32.totalorder %s23, %s26
      %p32 = scmp.eq.s32.totalorder %s13, 0
      %p33 = por %p31, %p32
      %p34 = scmp.ne.s32.totalorder %s23, %s26
      %p35 = scmp.eq.s32.totalorder %s18, 1
      %p36 = por %p34, %p35
      %p37 = scmp.ne.s32.totalorder %s26, %s27
      %p38 = scmp.eq.s32.totalorder %s18, 0
      %p39 = por %p37, %p38
      %p40 = scmp.ne.s32.totalorder %s26, %s27
      %p41 = scmp.eq.s32.totalorder %s19, 1
      %p42 = por %p40, %p41
      %p44 = scmp.ne.s32.totalorder %s27, %s43
      %p45 = scmp.eq.s32.totalorder %s19, 0
      %p46 = por %p44, %p45
      %s48 = sadd.s32 %s47, 1
      %p51 = scmp.eq.s32.totalorder %s13, 1
      %p52 = scmp.ne.s32.totalorder %s47, %s49
      %p53 = scmp.eq.s32.totalorder %s13, 0
      %p54 = por %p52, %p53
      %p55 = scmp.ne.s32.totalorder %s47, %s49
      %p56 = scmp.eq.s32.totalorder %s18, 1
      %p57 = por %p55, %p56
      %p58 = scmp.ne.s32.totalorder %s49, %s50
      %p59 = scmp.eq.s32.totalorder %s18, 0
      %p60 = por %p58, %p59
      %p61 = scmp.ne.s32.totalorder %s49, %s50
      %p62 = scmp.eq.s32.totalorder %s19, 1
      %p63 = por %p61, %p62
      %p65 = scmp.ne.s32.totalorder %s50, %s64
      %p66 = scmp.eq.s32.totalorder %s19, 0
      %p67 = por %p65, %p66
      %s69 = sadd.s32 %s68, 1
      %p72 = scmp.eq.s32.totalorder %s13, 1
      %p73 = scmp.ne.s32.totalorder %s68, %s70
      %p74 = scmp.eq.s32.totalorder %s13, 0
      %p75 = por %p73, %p74
      %p76 = scmp.ne.s32.totalorder %s68, %s70
      %p77 = scmp.eq.s32.totalorder %s18, 1
      %p78 = por %p76, %p77
      %p79 = scmp.ne.s32.totalorder %s70, %s71
      %p80 = scmp.eq.s32.totalorder %s18, 0
      %p81 = por %p79, %p80
      %p82 = scmp.ne.s32.totalorder %s70, %s71
      %p83 = scmp.eq.s32.totalorder %s19, 1
      %p84 = por %p82, %p83
      %p86 = scmp.ne.s32.totalorder %s71, %s85
      %p87 = scmp.eq.s32.totalorder %s19, 0
      %p88 = por %p86, %p87
      %s89 = ssub.s32 %s13, %s20
      %p90 = scmp.eq.s32.totalorder %s89, 0
      %s92 = sadd.s32 %s91, 1
      %s93 = scalar_select %p90, %s91, %s92
      %p96 = pneg %p90
      %p97 = scmp.eq.s32.totalorder %s13, 1
      %p98 = por %p96, %p97
      %p99 = scmp.ne.s32.totalorder %s91, %s94
      %p100 = scmp.eq.s32.totalorder %s13, 0
      %p101 = por %p99, %p100
      %p102 = scmp.ne.s32.totalorder %s91, %s94
      %p103 = scmp.eq.s32.totalorder %s18, 1
      %p104 = por %p102, %p103
      %p105 = scmp.ne.s32.totalorder %s94, %s95
      %p106 = scmp.eq.s32.totalorder %s18, 0
      %p107 = por %p105, %p106
      %p108 = scmp.ne.s32.totalorder %s94, %s95
      %p109 = scmp.eq.s32.totalorder %s19, 1
      %p110 = por %p108, %p109
      %p112 = scmp.ne.s32.totalorder %s95, %s111
      %p113 = scmp.eq.s32.totalorder %s19, 0
      %p114 = por %p112, %p113
      %p115 = scmp.le.s32.totalorder 1, %s13
      %p116 = scmp.lt.s32.totalorder %s13, 3
      %p117 = pnand %p115, %p116
      %p118 = pneg %p117
      // Predicated region
      $region9: #{tpu_custom_call.1} parent=5 // pred_check
        _
      $region10: #{tpu_custom_call.1} parent=5 // pred_check_branch
        %120 = sbr.rel (%p117) target = $region12
      $region11: #{tpu_custom_call.1} parent=5 // pred_region
        %s121 = ssub.s32 %s13, 1
        // Predicated region
        $region13: #{tpu_custom_call.1} parent=11 // pred_check
          %p122 = pneg %p60
        $region14: #{tpu_custom_call.1} parent=11 // pred_check_branch
          %124 = sbr.rel (%p122) target = $region16
        $region15: #{tpu_custom_call.1} parent=11 // pred_region
          %126 = vsyncadd [#allocation3], 0
          %s127 = sshll.u32 %s1, 4
          %s128 = int_to_ptr.hbm [resolvable:$true] %s127
          %s129 = sshll.u32 [#allocation2], 4
          %s130 = int_to_ptr.vmem [resolvable:$true] %s129
          %135 = dma.hbm_to_vmem [thread:$0]  %s128, 256, %s130, [#allocation3], 64, 64, 4
        $region16: #{tpu_custom_call.1} parent=11 // pred_fallthru
          _
        // Predicated region
        $region17: #{tpu_custom_call.1} parent=11 // pred_check
          %p136 = pneg %p81
        $region18: #{tpu_custom_call.1} parent=11 // pred_check_branch
          %138 = sbr.rel (%p136) target = $region20
        $region19: #{tpu_custom_call.1} parent=11 // pred_region
          _
        $region20: #{tpu_custom_call.1} parent=11 // pred_fallthru
          _
      $region12: #{tpu_custom_call.1} parent=5 // pred_fallthru
        _
      %p139 = scmp.lt.s32.totalorder %s13, 2
      // Predicated region
      $region21: #{tpu_custom_call.1} parent=5 // pred_check
        %p140 = pneg %p139
      $region22: #{tpu_custom_call.1} parent=5 // pred_check_branch
        %142 = sbr.rel (%p140) target = $region24
      $region23: #{tpu_custom_call.1} parent=5 // pred_region
        // Predicated region
        $region25: #{tpu_custom_call.1} parent=23 // pred_check
          %p143 = pneg %p33
        $region26: #{tpu_custom_call.1} parent=23 // pred_check_branch
          %145 = sbr.rel (%p143) target = $region28
        $region27: #{tpu_custom_call.1} parent=23 // pred_region
          %p146 = scmp.lt.s32.totalorder %s13, 1
          %s147 = scalar_select %p146, %s13, 1
          %s148 = smul.addr %s147, 4
          %s149 = smul.addr %s148, 4
          %s150 = scalar_lea.vmem %s0, %s149
        $region28: #{tpu_custom_call.1} parent=23 // pred_fallthru
          _
      $region24: #{tpu_custom_call.1} parent=5 // pred_fallthru
        _
      %p151 = scmp.le.s32.totalorder 1, %s13
      %p152 = scmp.lt.s32.totalorder %s13, 3
      %p153 = pnand %p151, %p152
      %p154 = pneg %p153
      // Predicated region
      $region29: #{tpu_custom_call.1} parent=5 // pred_check
        _
      $region30: #{tpu_custom_call.1} parent=5 // pred_check_branch
        %156 = sbr.rel (%p153) target = $region32
      $region31: #{tpu_custom_call.1} parent=5 // pred_region
        %s157 = ssub.s32 %s13, 1
        // Predicated region
        $region33: #{tpu_custom_call.1} parent=31 // pred_check
          %p158 = pneg %p60
        $region34: #{tpu_custom_call.1} parent=31 // pred_check_branch
          %160 = sbr.rel (%p158) target = $region36
        $region35: #{tpu_custom_call.1} parent=31 // pred_region
          %162 = dma.done [#allocation3], 256
        $region36: #{tpu_custom_call.1} parent=31 // pred_fallthru
          _
        %p163 = scmp.lt.s32.totalorder %s18, 1
        %s164 = scalar_select %p163, %s18, 1
        %s165 = smul.addr %s164, 4
        %s166 = smul.addr %s165, 4
        %s167 = scalar_lea.vmem %s0, %s166
        %p168 = pneg %p39
        %p169 = pneg %p36
        %p170 = pneg %p60
        %p171 = pneg %p57
        %p172 = pneg %p81
        %p173 = pneg %p78
        %p174 = pneg %p107
        %p175 = pneg %p104
        %s176 = sand.u32 %s94, 1
        %s177 = scalar_lea.sflag [#allocation4], %s176
        %s178 = sand.u32 %s94, 1
        %s179 = smul.addr %s178, 48
        %s180 = scalar_lea.vmem [#allocation5], %s179
        %p181 = scmp.lt.s32.totalorder %s18, 1
        %s182 = scalar_select %p181, %s18, 1
        %s183 = smul.addr %s182, 4
        %s184 = smul.addr %s183, 4
        %s185 = scalar_lea.vmem %s0, %s184
        %v187 = vld [vmem:[%s185] sm:$0xff]
        %v188 = vld [vmem:[%s185 + $0x8] sm:$0xff]
        %v191 = vunpack.c.l.b16 %v187
        %v192 = vunpack.c.h.b16 %v187
        %v193 = vunpack.c.l.b16 %v188
        %v194 = vpack.c.b16 %v191, %v191
        %v195 = vpack.c.b16 %v192, %v192
        %v196 = vpack.c.b16 %v193, %v193
        %v197 = vunpack.c.h.b16 %v188
        %v198 = vpack.c.b16 %v197, %v197
        %199 = vrot.lane.b32.xlu0 %v194, 127
        %v200 = vpop.permute.xlu0 %199
        %201 = vrot.lane.b32.xlu0 %v195, 127
        %v202 = vpop.permute.xlu0 %201
        %203 = vrot.lane.b32.xlu0 %v196, 127
        %v204 = vpop.permute.xlu0 %203
        %205 = vrot.lane.b32.xlu0 %v198, 127
        %v206 = vpop.permute.xlu0 %205
        %vm207 = vcmask 1039360
        %v208 = vsel %vm207, %v200, %v202
        %v209 = vsel %vm207, %v202, %v204
        %v210 = vsel %vm207, %v204, %v206
        %211 = vrot.lane.b32.xlu0 %v194, 126
        %v212 = vpop.permute.xlu0 %211
        %213 = vrot.lane.b32.xlu0 %v195, 126
        %v214 = vpop.permute.xlu0 %213
        %215 = vrot.lane.b32.xlu0 %v196, 126
        %v216 = vpop.permute.xlu0 %215
        %217 = vrot.lane.b32.xlu0 %v198, 126
        %v218 = vpop.permute.xlu0 %217
        %vm219 = vcmask 1031168
        %v220 = vsel %vm219, %v212, %v214
        %v221 = vsel %vm219, %v214, %v216
        %v222 = vsel %vm219, %v216, %v218
        %223 = vrot.lane.b32.xlu0 %v194, 110
        %v224 = vpop.permute.xlu0 %223
        %225 = vrot.lane.b32.xlu0 %v195, 110
        %v226 = vpop.permute.xlu0 %225
        %227 = vrot.lane.b32.xlu0 %v196, 110
        %v228 = vpop.permute.xlu0 %227
        %229 = vrot.lane.b32.xlu0 %v198, 110
        %v230 = vpop.permute.xlu0 %229
        %vm231 = vcmask 900096
        %v232 = vsel %vm231, %v224, %v226
        %v233 = vsel %vm231, %v226, %v228
        %v234 = vsel %vm231, %v228, %v230
        %235 = vrot.lane.b32.xlu0 %v194, 109
        %v236 = vpop.permute.xlu0 %235
        %237 = vrot.lane.b32.xlu0 %v195, 109
        %v238 = vpop.permute.xlu0 %237
        %239 = vrot.lane.b32.xlu0 %v196, 109
        %v240 = vpop.permute.xlu0 %239
        %241 = vrot.lane.b32.xlu0 %v198, 109
        %v242 = vpop.permute.xlu0 %241
        %vm243 = vcmask 891904
        %v244 = vsel %vm243, %v236, %v238
        %v245 = vsel %vm243, %v238, %v240
        %v246 = vsel %vm243, %v240, %v242
        %247 = vrot.lane.b32.xlu0 %v194, 108
        %v248 = vpop.permute.xlu0 %247
        %249 = vrot.lane.b32.xlu0 %v195, 108
        %v250 = vpop.permute.xlu0 %249
        %251 = vrot.lane.b32.xlu0 %v196, 108
        %v252 = vpop.permute.xlu0 %251
        %253 = vrot.lane.b32.xlu0 %v198, 108
        %v254 = vpop.permute.xlu0 %253
        %vm255 = vcmask 883712
        %v256 = vsel %vm255, %v248, %v250
        %v257 = vsel %vm255, %v250, %v252
        %v258 = vsel %vm255, %v252, %v254
        %259 = vrot.lane.b32.xlu0 %v194, 92
        %v260 = vpop.permute.xlu0 %259
        %261 = vrot.lane.b32.xlu0 %v195, 92
        %v262 = vpop.permute.xlu0 %261
        %263 = vrot.lane.b32.xlu0 %v196, 92
        %v264 = vpop.permute.xlu0 %263
        %265 = vrot.lane.b32.xlu0 %v198, 92
        %v266 = vpop.permute.xlu0 %265
        %vm267 = vcmask 752640
        %v268 = vsel %vm267, %v260, %v262
        %v269 = vsel %vm267, %v262, %v264
        %v270 = vsel %vm267, %v264, %v266
        %271 = vrot.lane.b32.xlu0 %v194, 91
        %v272 = vpop.permute.xlu0 %271
        %273 = vrot.lane.b32.xlu0 %v195, 91
        %v274 = vpop.permute.xlu0 %273
        %275 = vrot.lane.b32.xlu0 %v196, 91
        %v276 = vpop.permute.xlu0 %275
        %277 = vrot.lane.b32.xlu0 %v198, 91
        %v278 = vpop.permute.xlu0 %277
        %vm279 = vcmask 744448
        %v280 = vsel %vm279, %v272, %v274
        %v281 = vsel %vm279, %v274, %v276
        %v282 = vsel %vm279, %v276, %v278
        %283 = vrot.lane.b32.xlu0 %v194, 90
        %v284 = vpop.permute.xlu0 %283
        %285 = vrot.lane.b32.xlu0 %v195, 90
        %v286 = vpop.permute.xlu0 %285
        %287 = vrot.lane.b32.xlu0 %v196, 90
        %v288 = vpop.permute.xlu0 %287
        %289 = vrot.lane.b32.xlu0 %v198, 90
        %v290 = vpop.permute.xlu0 %289
        %vm291 = vcmask 736256
        %v292 = vsel %vm291, %v284, %v286
        %v293 = vsel %vm291, %v286, %v288
        %v294 = vsel %vm291, %v288, %v290
        %vm295 = vcmask 1043456
        %v298 = vsel %vm295, %v194, %v208
        %v302 = vsel %vm295, %v195, %v209
        %v306 = vsel %vm295, %v196, %v210
        %v310 = vsel %vm295, %v220, %v232
        %v314 = vsel %vm295, %v221, %v233
        %v318 = vsel %vm295, %v222, %v234
        %v322 = vsel %vm295, %v244, %v256
        %v326 = vsel %vm295, %v245, %v257
        %v330 = vsel %vm295, %v246, %v258
        %v334 = vsel %vm295, %v268, %v280
        %v338 = vsel %vm295, %v269, %v281
        %v342 = vsel %vm295, %v270, %v282
        %v344 = vld [vmem:[#allocation2] sm:$0xf]
        %v345 = vld [vmem:[#allocation2 + $0x4] sm:$0xf]
        %v346 = vld [vmem:[#allocation2 + $0x8] sm:$0xf]
        %v347 = vld [vmem:[#allocation2 + $0xc] sm:$0xf]
        %v348 = vld [vmem:[%s2] sm:$0xff]
        %v349 = vld [vmem:[%s2 + $0x8] sm:$0xff]
        %v350 = vld [vmem:[%s2 + $0x10] sm:$0xff]
        %v351 = vld [vmem:[%s2 + $0x18] sm:$0xff]
        %353 = vset.pattern.permute.xlu0 0
        %354 = vperm.xlu0 %353, %v348
        %v355 = vpop.permute.xlu0 %354
        %358 = vset.pattern.permute.xlu0 0
        %359 = vperm.xlu0 %358, %v349
        %v360 = vpop.permute.xlu0 %359
        %363 = vset.pattern.permute.xlu0 0
        %364 = vperm.xlu0 %363, %v350
        %v365 = vpop.permute.xlu0 %364
        %368 = vset.pattern.permute.xlu0 0
        %369 = vperm.xlu0 %368, %v351
        %v370 = vpop.permute.xlu0 %369
        %v376 = vunpack.c.l.b16 %v344
        %v377 = vunpack.c.l.b16 %v345
        %v378 = vunpack.c.l.b16 %v346
        %v379 = vunpack.c.l.b16 %v347
        %v380 = vpack.c.b16 %v377, %v376
        %v381 = vpack.c.b16 %v379, %v378
        %vm382 = vcmask 588800
        %v384 = vsel %vm382, %v380, 0
        %v387 = vsel %vm382, %v381, 0
        %v390 = vsel %vm295, %v292, 0
        %v393 = vsel %vm295, %v293, 0
        %v396 = vsel %vm295, %v294, 0
        %398 = vmatpush.bf16.msra.mxu0 0
        %399 = vmatpush.bf16.msra.mxu0 0
        %400 = vmatpush.bf16.msra.mxu0 0
        %401 = vmatpush.bf16.msra.mxu0 %v390
        %402 = vmatpush.bf16.msra.mxu0 %v334
        %403 = vmatpush.bf16.msra.mxu0 %v322
        %404 = vmatpush.bf16.msra.mxu0 %v310
        %405 = vmatpush.bf16.msra.mxu0 %v298
        %406 = vmatmul.bf16.gmra.mxu0 %v384
        %v407 = vpop.f32.mrf.mxu0
        %v408 = vadd.f32 %v355, %v407
        %v409 = vpop.f32.mrf.mxu0
        %v410 = vadd.f32 %v360, %v409
        %411 = vmatmul.bf16.gmra.mxu0 %v387
        %v412 = vpop.f32.mrf.mxu0
        %v413 = vadd.f32 %v365, %v412
        %v414 = vpop.f32.mrf.mxu0
        %v415 = vadd.f32 %v370, %v414
        %416 = vdwg.mxu0
        %417 = vmatpush.bf16.msra.mxu0 0
        %418 = vmatpush.bf16.msra.mxu0 0
        %419 = vmatpush.bf16.msra.mxu0 0
        %420 = vmatpush.bf16.msra.mxu0 %v393
        %421 = vmatpush.bf16.msra.mxu0 %v338
        %422 = vmatpush.bf16.msra.mxu0 %v326
        %423 = vmatpush.bf16.msra.mxu0 %v314
        %424 = vmatpush.bf16.msra.mxu0 %v302
        %425 = vmatmul.bf16.gmra.mxu0 %v384
        %v426 = vpop.f32.mrf.mxu0
        %v427 = vadd.f32 %v355, %v426
        %v428 = vpop.f32.mrf.mxu0
        %v429 = vadd.f32 %v360, %v428
        %430 = vmatmul.bf16.gmra.mxu0 %v387
        %v431 = vpop.f32.mrf.mxu0
        %v432 = vadd.f32 %v365, %v431
        %v433 = vpop.f32.mrf.mxu0
        %v434 = vadd.f32 %v370, %v433
        %435 = vdwg.mxu0
        %436 = vmatpush.bf16.msra.mxu0 0
        %437 = vmatpush.bf16.msra.mxu0 0
        %438 = vmatpush.bf16.msra.mxu0 0
        %439 = vmatpush.bf16.msra.mxu0 %v396
        %440 = vmatpush.bf16.msra.mxu0 %v342
        %441 = vmatpush.bf16.msra.mxu0 %v330
        %442 = vmatpush.bf16.msra.mxu0 %v318
        %443 = vmatpush.bf16.msra.mxu0 %v306
        %444 = vmatmul.bf16.gmra.mxu0 %v384
        %v445 = vpop.f32.mrf.mxu0
        %v446 = vadd.f32 %v355, %v445
        %v447 = vpop.f32.mrf.mxu0
        %v448 = vadd.f32 %v360, %v447
        %449 = vmatmul.bf16.gmra.mxu0 %v387
        %v450 = vpop.f32.mrf.mxu0
        %v451 = vadd.f32 %v365, %v450
        %v452 = vpop.f32.mrf.mxu0
        %v453 = vadd.f32 %v370, %v452
        %454 = vdwg.mxu0
        %v455 = vpack.c.bf16 %v427, %v408
        %v456 = vpack.c.bf16 %v446, %v446
        %v457 = vpack.c.bf16 %v429, %v410
        %v458 = vpack.c.bf16 %v448, %v448
        %v459 = vpack.c.bf16 %v432, %v413
        %v460 = vpack.c.bf16 %v451, %v451
        %v461 = vpack.c.bf16 %v434, %v415
        %v462 = vpack.c.bf16 %v453, %v453
        %463 = vst [vmem:[%s180] sm:$0xff] %v455
        %464 = vst [vmem:[%s180 + $0x8] sm:$0xf] %v456
        %465 = vst [vmem:[%s180 + $0xc] sm:$0xff] %v457
        %466 = vst [vmem:[%s180 + $0x14] sm:$0xf] %v458
        %467 = vst [vmem:[%s180 + $0x18] sm:$0xff] %v459
        %468 = vst [vmem:[%s180 + $0x20] sm:$0xf] %v460
        %469 = vst [vmem:[%s180 + $0x24] sm:$0xff] %v461
        %470 = vst [vmem:[%s180 + $0x2c] sm:$0xf] %v462
        %s471 = sand.u32 %s94, 1
        %s472 = scalar_lea.sflag [#allocation4], %s471
        %s473 = sand.u32 %s94, 1
        %s474 = smul.addr %s473, 48
        %s475 = scalar_lea.vmem [#allocation5], %s474
        // Predicated region
        $region37: #{tpu_custom_call.1} parent=31 // pred_check
          %p476 = pneg %p104
        $region38: #{tpu_custom_call.1} parent=31 // pred_check_branch
          %478 = sbr.rel (%p476) target = $region40
        $region39: #{tpu_custom_call.1} parent=31 // pred_region
          %480 = vsyncadd %s472, 0
          %s481 = smul.addr %s18, 12
          %s482 = smul.addr %s481, 4
          %s483 = scalar_lea.hbm %s3, %s482
          %s484 = sshll.u32 %s475, 4
          %s485 = int_to_ptr.vmem [resolvable:$true] %s484
          %s486 = sshll.u32 %s483, 4
          %s487 = int_to_ptr.hbm [resolvable:$true] %s486
          %492 = dma.vmem_to_hbm [thread:$0]  %s485, 768, %s487, %s472, 192, 192, 12
        $region40: #{tpu_custom_call.1} parent=31 // pred_fallthru
          _
      $region32: #{tpu_custom_call.1} parent=5 // pred_fallthru
        _
      %p493 = scmp.le.s32.totalorder 2, %s13
      // Predicated region
      $region41: #{tpu_custom_call.1} parent=5 // pred_check
        %p494 = pneg %p493
      $region42: #{tpu_custom_call.1} parent=5 // pred_check_branch
        %496 = sbr.rel (%p494) target = $region44
      $region43: #{tpu_custom_call.1} parent=5 // pred_region
        %s497 = ssub.s32 %s13, 2
        // Predicated region
        $region45: #{tpu_custom_call.1} parent=43 // pred_check
          %p498 = pneg %p110
        $region46: #{tpu_custom_call.1} parent=43 // pred_check_branch
          %500 = sbr.rel (%p498) target = $region48
        $region47: #{tpu_custom_call.1} parent=43 // pred_region
          %s501 = sand.u32 %s95, 1
          %s502 = scalar_lea.sflag [#allocation4], %s501
          %s503 = sand.u32 %s95, 1
          %s504 = smul.addr %s503, 48
          %s505 = scalar_lea.vmem [#allocation5], %s504
          %507 = dma.done %s502, 768
        $region48: #{tpu_custom_call.1} parent=43 // pred_fallthru
          _
      $region44: #{tpu_custom_call.1} parent=5 // pred_fallthru
        _
    $region6: #{tpu_custom_call.1} parent=1 // loop_footer
      %s17 = sadd.s32 1, %s13
    $region7: #{tpu_custom_call.1} parent=1 // loop_footer_branch
      %12 = sbr.rel target = $region3
    $region8: #{tpu_custom_call.1} parent=1 // loop_exit
      _
    %508 = vsyncpa [#allocation3], 1
    %s509 = scalar_lea.sflag [#allocation3], 1
    %510 = vsyncpa %s509, 1
    %511 = vsyncpa [#allocation4], 1
    %s512 = scalar_lea.sflag [#allocation4], 1
    %513 = vsyncpa %s512, 1

</llo_original>
